<compile_context>
chip_gen: v6e
topology: v6e:2x2x1
jax: 0.10.0
libtpu: 0.0.40
codegen_flags: <defaults>
</compile_context>

<pallas_src>
import jax
import jax.numpy as jnp
from jax.experimental import pallas as pl
from jax.experimental.pallas import tpu as pltpu

SUBLANES = 8
LANES = 128
MIN_ALIGN = SUBLANES * LANES  # 1024 elements


def _make_sumsq_kernel(tile_rows, rows, needs_mask):
    """Kernel computing per-layer (8,128) partial sums of squares per block."""
    groups = tile_rows // SUBLANES

    def kernel(l1_ref, l2_ref, l3_ref, o_ref):
        def partial(ref, mask):
            x = ref[...].astype(jnp.float32)
            if mask is not None:
                # Mask BEFORE squaring so OOB garbage (possibly NaN) is dropped.
                x = jnp.where(mask, x, 0.0)
            sq = x * x
            # Fold groups of 8 sublane-rows: splits only the leading dim, so no
            # (8,128)-tile boundary is crossed -> pure vreg-wise VPU adds.  The
            # expensive cross-lane reduce happens once, outside the kernel.
            return jnp.sum(sq.reshape(groups, SUBLANES, LANES), axis=0)

        def write_all(mask):
            o_ref[0, 0] = partial(l1_ref, mask)
            o_ref[1, 0] = partial(l2_ref, mask)
            o_ref[2, 0] = partial(l3_ref, mask)

        if not needs_mask:
            write_all(None)
        else:
            pid = pl.program_id(0)
            last = pl.num_programs(0) - 1

            # Full blocks: cheapest path (no iota / compare / select).
            @pl.when(pid != last)
            def _():
                write_all(None)

            # Tail block only: mask rows past the valid range.
            @pl.when(pid == last)
            def _():
                valid_rows = rows % tile_rows  # > 0 because needs_mask
                row_idx = jax.lax.broadcasted_iota(
                    jnp.int32, (tile_rows, LANES), 0
                )
                write_all(row_idx < valid_rows)

    return kernel


def model_forward(layer1, layer2, layer3, max_tile_rows=4096):
    """(mean(l1^2) + mean(l2^2) + mean(l3^2)) / 3 with a row-tiled Pallas kernel."""
    size = layer1.shape[0]

    # 1024-aligned prefix goes through the kernel; the short tail is summed in
    # plain JAX (static slice, < 1024 elements -> negligible).
    aligned = (size // MIN_ALIGN) * MIN_ALIGN
    rows = aligned // LANES

    def tail_sumsq(x):
        if aligned == size:
            return jnp.float32(0.0)
        t = x[aligned:].astype(jnp.float32)
        return jnp.sum(t * t)

    tails = jnp.stack([tail_sumsq(layer1), tail_sumsq(layer2), tail_sumsq(layer3)])

    if rows == 0:
        # Whole array is shorter than one (8,128) tile; JAX tail covered it.
        sums = tails
    else:
        tile_rows = min(max_tile_rows, rows)  # rows is a multiple of 8
        # v7x: avoid a 1-block grid (one idle TensorCore) when we can split.
        if tile_rows >= rows and rows >= 2 * SUBLANES:
            tile_rows = max(SUBLANES, ((rows // 2) // SUBLANES) * SUBLANES)
        num_blocks = pl.cdiv(rows, tile_rows)
        needs_mask = (rows % tile_rows) != 0  # last block partially valid

        kernel = _make_sumsq_kernel(tile_rows, rows, needs_mask)
        in_spec = pl.BlockSpec((tile_rows, LANES), lambda i: (i, 0))
        dtype_bytes = jnp.dtype(layer1.dtype).itemsize

        partials = pl.pallas_call(
            kernel,
            out_shape=jax.ShapeDtypeStruct(
                (3, num_blocks, SUBLANES, LANES), jnp.float32
            ),
            grid=(num_blocks,),
            in_specs=[in_spec, in_spec, in_spec],
            out_specs=pl.BlockSpec(
                (3, 1, SUBLANES, LANES), lambda i: (0, i, 0, 0)
            ),
            compiler_params=pltpu.CompilerParams(
                dimension_semantics=("parallel",),
                vmem_limit_bytes=32 * 1024 * 1024,
            ),
            cost_estimate=pl.CostEstimate(
                flops=2 * 3 * aligned,
                transcendentals=0,
                bytes_accessed=3 * aligned * dtype_bytes
                + 3 * num_blocks * SUBLANES * LANES * 4,
            ),
        )(
            layer1[:aligned].reshape(rows, LANES),   # contiguous reshape: free
            layer2[:aligned].reshape(rows, LANES),
            layer3[:aligned].reshape(rows, LANES),
        )

        sums = jnp.sum(partials, axis=(1, 2, 3)) + tails  # (3,) per-layer sumsq

    n = jnp.float32(size)
    return jnp.sum(sums / n) / jnp.float32(3.0)


if __name__ == "__main__":
    # Deterministic parameter init mirroring the PyTorch __init__:
    #   layer1 = randn(size) * scale ; layer2 = randn(size) ; layer3 = randn(size) / scale
    size = 1024
    scale = 100.0

    key = jax.random.PRNGKey(0)
    k1, k2, k3 = jax.random.split(key, 3)
    layer1 = jax.random.normal(k1, (size,), dtype=jnp.float32) * scale
    layer2 = jax.random.normal(k2, (size,), dtype=jnp.float32)
    layer3 = jax.random.normal(k3, (size,), dtype=jnp.float32) / scale

    result = jax.block_until_ready(model_forward(layer1, layer2, layer3))

    # Pure-JAX reference check.
    ref = (jnp.mean(layer1 ** 2) + jnp.mean(layer2 ** 2) + jnp.mean(layer3 ** 2)) / 3.0
    assert jnp.allclose(result, ref, rtol=1e-5, atol=1e-5), (result, ref)

    # Larger, non-1024-aligned, non-tile-divisible size: exercises the
    # multi-block pipeline, the pl.when-gated masked tail block, and the
    # plain-JAX sub-1024 tail (no jnp.pad copy anywhere).
    big = 1024 * 1000 + 500  # aligned rows = 8000, tile_rows = 4096 -> 2 blocks
    kb1, kb2, kb3 = jax.random.split(jax.random.PRNGKey(1), 3)
    b1 = jax.random.normal(kb1, (big,), dtype=jnp.float32) * scale
    b2 = jax.random.normal(kb2, (big,), dtype=jnp.float32)
    b3 = jax.random.normal(kb3, (big,), dtype=jnp.float32) / scale
    res_big = jax.block_until_ready(model_forward(b1, b2, b3))
    ref_big = (jnp.mean(b1 ** 2) + jnp.mean(b2 ** 2) + jnp.mean(b3 ** 2)) / 3.0
    assert jnp.allclose(res_big, ref_big, rtol=1e-4, atol=1e-4), (res_big, ref_big)

    print("KERNEL_OK")
</pallas_src>

<mosaic_0001>
module attributes {stable_mosaic.version = 11 : i64} {
  func.func @kernel(%arg0: i32, %arg1: memref<8x128xf32, #tpu.memory_space<vmem>>, %arg2: memref<8x128xf32, #tpu.memory_space<vmem>>, %arg3: memref<8x128xf32, #tpu.memory_space<vmem>>, %arg4: memref<3x1x8x128xf32, #tpu.memory_space<vmem>>) attributes {dimension_semantics = [#tpu.dimension_semantics<parallel>], iteration_bounds = array<i64: 1>, scalar_prefetch = 0 : i64, scratch_operands = 0 : i64, tpu.core_type = #tpu.core_type<tc>, window_params = [{transform_indices = @transform_0, window_bounds = array<i64: 8, 128>}, {transform_indices = @transform_1, window_bounds = array<i64: 8, 128>}, {transform_indices = @transform_2, window_bounds = array<i64: 8, 128>}, {transform_indices = @transform_3, window_bounds = array<i64: 3, 1, 8, 128>}]} {
    %c0 = arith.constant 0 : index
    %c0_0 = arith.constant 0 : index
    %0 = vector.load %arg1[%c0, %c0_0] : memref<8x128xf32, #tpu.memory_space<vmem>>, vector<8x128xf32>
    %1 = arith.mulf %0, %0 : vector<8x128xf32>
    %2 = vector.shape_cast %1 : vector<8x128xf32> to vector<1x8x128xf32>
    %cst = arith.constant dense<0.000000e+00> : vector<8x128xf32>
    %3 = vector.multi_reduction <add>, %2, %cst [0] : vector<1x8x128xf32> to vector<8x128xf32>
    %c0_1 = arith.constant 0 : index
    %c0_2 = arith.constant 0 : index
    %c0_3 = arith.constant 0 : index
    %c0_4 = arith.constant 0 : index
    %4 = vector.load %arg4[%c0_1, %c0_2, %c0_3, %c0_4] : memref<3x1x8x128xf32, #tpu.memory_space<vmem>>, vector<1x1x8x128xf32>
    %5 = vector.shape_cast %4 : vector<1x1x8x128xf32> to vector<8x128xf32>
    %6 = vector.shape_cast %3 : vector<8x128xf32> to vector<1x1x8x128xf32>
    tpu.vector_store %arg4[%c0_1, %c0_2, %c0_3, %c0_4], %6 {strides = array<i32>} : memref<3x1x8x128xf32, #tpu.memory_space<vmem>>, vector<1x1x8x128xf32>,
    %c0_5 = arith.constant 0 : index
    %c0_6 = arith.constant 0 : index
    %7 = vector.load %arg2[%c0_5, %c0_6] : memref<8x128xf32, #tpu.memory_space<vmem>>, vector<8x128xf32>
    %8 = arith.mulf %7, %7 : vector<8x128xf32>
    %9 = vector.shape_cast %8 : vector<8x128xf32> to vector<1x8x128xf32>
    %cst_7 = arith.constant dense<0.000000e+00> : vector<8x128xf32>
    %10 = vector.multi_reduction <add>, %9, %cst_7 [0] : vector<1x8x128xf32> to vector<8x128xf32>
    %c1 = arith.constant 1 : index
    %c0_8 = arith.constant 0 : index
    %c0_9 = arith.constant 0 : index
    %c0_10 = arith.constant 0 : index
    %11 = vector.load %arg4[%c1, %c0_8, %c0_9, %c0_10] : memref<3x1x8x128xf32, #tpu.memory_space<vmem>>, vector<1x1x8x128xf32>
    %12 = vector.shape_cast %11 : vector<1x1x8x128xf32> to vector<8x128xf32>
    %13 = vector.shape_cast %10 : vector<8x128xf32> to vector<1x1x8x128xf32>
    tpu.vector_store %arg4[%c1, %c0_8, %c0_9, %c0_10], %13 {strides = array<i32>} : memref<3x1x8x128xf32, #tpu.memory_space<vmem>>, vector<1x1x8x128xf32>,
    %c0_11 = arith.constant 0 : index
    %c0_12 = arith.constant 0 : index
    %14 = vector.load %arg3[%c0_11, %c0_12] : memref<8x128xf32, #tpu.memory_space<vmem>>, vector<8x128xf32>
    %15 = arith.mulf %14, %14 : vector<8x128xf32>
    %16 = vector.shape_cast %15 : vector<8x128xf32> to vector<1x8x128xf32>
    %cst_13 = arith.constant dense<0.000000e+00> : vector<8x128xf32>
    %17 = vector.multi_reduction <add>, %16, %cst_13 [0] : vector<1x8x128xf32> to vector<8x128xf32>
    %c2 = arith.constant 2 : index
    %c0_14 = arith.constant 0 : index
    %c0_15 = arith.constant 0 : index
    %c0_16 = arith.constant 0 : index
    %18 = vector.load %arg4[%c2, %c0_14, %c0_15, %c0_16] : memref<3x1x8x128xf32, #tpu.memory_space<vmem>>, vector<1x1x8x128xf32>
    %19 = vector.shape_cast %18 : vector<1x1x8x128xf32> to vector<8x128xf32>
    %20 = vector.shape_cast %17 : vector<8x128xf32> to vector<1x1x8x128xf32>
    tpu.vector_store %arg4[%c2, %c0_14, %c0_15, %c0_16], %20 {strides = array<i32>} : memref<3x1x8x128xf32, #tpu.memory_space<vmem>>, vector<1x1x8x128xf32>,
    return
  }
  func.func @transform_0(%arg0: i32) -> (i32, i32) {
    %c0_i32 = arith.constant 0 : i32
    %c0_i32_0 = arith.constant 0 : i32
    return %arg0, %c0_i32 : i32, i32
  }
  func.func @transform_1(%arg0: i32) -> (i32, i32) {
    %c0_i32 = arith.constant 0 : i32
    %c0_i32_0 = arith.constant 0 : i32
    return %arg0, %c0_i32 : i32, i32
  }
  func.func @transform_2(%arg0: i32) -> (i32, i32) {
    %c0_i32 = arith.constant 0 : i32
    %c0_i32_0 = arith.constant 0 : i32
    return %arg0, %c0_i32 : i32, i32
  }
  func.func @transform_3(%arg0: i32) -> (i32, i32, i32, i32) {
    %c0_i32 = arith.constant 0 : i32
    %c0_i32_0 = arith.constant 0 : i32
    %c0_i32_1 = arith.constant 0 : i32
    %c0_i32_2 = arith.constant 0 : i32
    return %c0_i32, %arg0, %c0_i32_0, %c0_i32_1 : i32, i32, i32, i32
  }
}

</mosaic_0001>

<llo_original>
// kernel: tpu_custom_call.1
$region0: #{tpu_custom_call.1}
  #allocation0 [shape = 'u32[]', space=smem, size = 0x4, offset = 0x4, fixed_abs, tag = 'smem constant byte address 0x4 - core index']
  #allocation1 [shape = 'u32[144,128]{1,0:T(1,128)}', space=vmem, size = 0x12000, scoped, tag = 'internal scratch']
  %s0 = inlined_call_operand.hbm [shape: f32[8,128], index: 0, kind: input, shape index: {}]
  %s1 = inlined_call_operand.hbm [shape: f32[8,128], index: 1, kind: input, shape index: {}]
  %s2 = inlined_call_operand.hbm [shape: f32[8,128], index: 2, kind: input, shape index: {}]
  %s3 = inlined_call_operand.hbm [shape: f32[3,1,8,128], index: 3, kind: output, shape index: {}]
  %s4 = sld [smem:[#allocation0]]
  $region34: #{tpu_custom_call.1} parent=0
    _
  %s6 = ssub.s32 1, %s4
  %s7 = scalar_select 0, %s6, %s4
  $region1: #{tpu_custom_call.1} parent=0
    #allocation2 [shape = 'u8[4096]{0}', space=vmem, size = 0x1000, scoped, tag = 'input window, operand 0, single buffered']
    #allocation3 [shape = 's32[1]{0}', space=sflag, size = 0x4, scoped, tag = 'scoped memory for tpu_custom_call.1']
    #allocation4 [shape = 's32[1]{0}', space=sflag, size = 0x4, scoped, tag = 'scoped memory for tpu_custom_call.1']
    #allocation5 [shape = 'u8[4096]{0}', space=vmem, size = 0x1000, scoped, tag = 'input window, operand 1, single buffered']
    #allocation6 [shape = 's32[1]{0}', space=sflag, size = 0x4, scoped, tag = 'scoped memory for tpu_custom_call.1']
    #allocation7 [shape = 'u8[4096]{0}', space=vmem, size = 0x1000, scoped, tag = 'input window, operand 2, single buffered']
    #allocation8 [shape = 'u8[12288]{0}', space=vmem, size = 0x3000, scoped, tag = 'output window, operand 0, single buffered']
    %8 = vsyncpa [#allocation3], 0
    %9 = vsyncpa [#allocation6], 0
    %10 = vsyncpa [#allocation4], 0
    // Predicated region
    $region2: #{tpu_custom_call.1} parent=1 // pred_check
      _
    $region3: #{tpu_custom_call.1} parent=1 // pred_check_branch
      %12 = sbr.rel (0) target = $region5
    $region4: #{tpu_custom_call.1} parent=1 // pred_region
      %s14 = ssub.s32 128, 128
      %15 = vsyncadd [#allocation3], %s14
      %s17 = sshll.u32 [#allocation2], 4
      %s18 = int_to_ptr.vmem [resolvable:$true] %s17
      %20 = dma.hbm_to_vmem [thread:$0]  %s0, 128, %s18, [#allocation3]
    $region5: #{tpu_custom_call.1} parent=1 // pred_fallthru
      _
    // Predicated region
    $region6: #{tpu_custom_call.1} parent=1 // pred_check
      _
    $region7: #{tpu_custom_call.1} parent=1 // pred_check_branch
      %22 = sbr.rel (0) target = $region9
    $region8: #{tpu_custom_call.1} parent=1 // pred_region
      %s24 = ssub.s32 128, 128
      %25 = vsyncadd [#allocation6], %s24
      %s27 = sshll.u32 [#allocation5], 4
      %s28 = int_to_ptr.vmem [resolvable:$true] %s27
      %30 = dma.hbm_to_vmem [thread:$0]  %s1, 128, %s28, [#allocation6]
    $region9: #{tpu_custom_call.1} parent=1 // pred_fallthru
      _
    // Predicated region
    $region10: #{tpu_custom_call.1} parent=1 // pred_check
      _
    $region11: #{tpu_custom_call.1} parent=1 // pred_check_branch
      %32 = sbr.rel (0) target = $region13
    $region12: #{tpu_custom_call.1} parent=1 // pred_region
      %s34 = ssub.s32 128, 128
      %35 = vsyncadd [#allocation6], %s34
      %s37 = sshll.u32 [#allocation7], 4
      %s38 = int_to_ptr.vmem [resolvable:$true] %s37
      %40 = dma.hbm_to_vmem [thread:$0]  %s2, 128, %s38, [#allocation6]
    $region13: #{tpu_custom_call.1} parent=1 // pred_fallthru
      _
    // Predicated region
    $region14: #{tpu_custom_call.1} parent=1 // pred_check
      _
    $region15: #{tpu_custom_call.1} parent=1 // pred_check_branch
      %42 = sbr.rel (0) target = $region17
    $region16: #{tpu_custom_call.1} parent=1 // pred_region
      %43 = dma.done [#allocation3], 128
    $region17: #{tpu_custom_call.1} parent=1 // pred_fallthru
      _
    // Predicated region
    $region18: #{tpu_custom_call.1} parent=1 // pred_check
      _
    $region19: #{tpu_custom_call.1} parent=1 // pred_check_branch
      %45 = sbr.rel (0) target = $region21
    $region20: #{tpu_custom_call.1} parent=1 // pred_region
      %46 = dma.done [#allocation6], 128
    $region21: #{tpu_custom_call.1} parent=1 // pred_fallthru
      _
    // Predicated region
    $region22: #{tpu_custom_call.1} parent=1 // pred_check
      _
    $region23: #{tpu_custom_call.1} parent=1 // pred_check_branch
      %48 = sbr.rel (0) target = $region25
    $region24: #{tpu_custom_call.1} parent=1 // pred_region
      %49 = dma.done [#allocation6], 128
    $region25: #{tpu_custom_call.1} parent=1 // pred_fallthru
      _
    %v50 = vld [vmem:[#allocation2] sm:$0xff]
    %v51 = vmul.f32 %v50, %v50
    %v52 = vadd.f32 %v51, 0.0
    %53 = vst [vmem:[#allocation8] sm:$0xff] %v52
    %v54 = vld [vmem:[#allocation5] sm:$0xff]
    %v55 = vmul.f32 %v54, %v54
    %v56 = vadd.f32 %v55, 0.0
    %s57 = scalar_lea.vmem [#allocation8], 8
    %58 = vst [vmem:[%s57] sm:$0xff] %v56
    %v59 = vld [vmem:[#allocation7] sm:$0xff]
    %v60 = vmul.f32 %v59, %v59
    %v61 = vadd.f32 %v60, 0.0
    %s62 = scalar_lea.vmem [#allocation8], 16
    %63 = vst [vmem:[%s62] sm:$0xff] %v61
    // Predicated region
    $region26: #{tpu_custom_call.1} parent=1 // pred_check
      _
    $region27: #{tpu_custom_call.1} parent=1 // pred_check_branch
      %65 = sbr.rel (0) target = $region29
    $region28: #{tpu_custom_call.1} parent=1 // pred_region
      %s67 = ssub.s32 384, 384
      %68 = vsyncadd [#allocation4], %s67
      %s69 = sshll.u32 [#allocation8], 4
      %s70 = int_to_ptr.vmem [resolvable:$true] %s69
      %75 = dma.vmem_to_hbm [thread:$0]  %s70, 384, %s3, [#allocation4], 128, 128, 8
    $region29: #{tpu_custom_call.1} parent=1 // pred_fallthru
      _
    // Predicated region
    $region30: #{tpu_custom_call.1} parent=1 // pred_check
      _
    $region31: #{tpu_custom_call.1} parent=1 // pred_check_branch
      %77 = sbr.rel (0) target = $region33
    $region32: #{tpu_custom_call.1} parent=1 // pred_region
      %78 = dma.done [#allocation4], 384
    $region33: #{tpu_custom_call.1} parent=1 // pred_fallthru
      _
    %79 = vsyncpa [#allocation3], 1
    %80 = vsyncpa [#allocation6], 1
    %81 = vsyncpa [#allocation4], 1

</llo_original>
